<compile_context>
chip_gen: v7x
topology: tpu7x:2x2x1
jax: 0.10.0
libtpu: 0.0.40
codegen_flags: <defaults>
</compile_context>

<pallas_src>
import jax
import jax.numpy as jnp
from jax.experimental import pallas as pl
from jax.experimental.pallas import tpu as pltpu

_LANES = 128                  # vreg lane width
_OUT_LANES = 2 * _LANES       # interleaved (y0, y1) output row width
_MAX_TILE_ROWS = 2048         # 1 MiB input / 2 MiB output per block
_MIN_SLAB = 8 * _LANES        # smallest slab: 8 sublanes x 128 lanes
_PALLAS_MIN_BATCH = 1 << 17   # below this, a fused XLA FMA is strictly cheaper


def _round_up(x, m):
    return ((x + m - 1) // m) * m


def _linear_kernel(w2_ref, b2_ref, x_ref, o_ref):
    # w2_ref: VMEM f32[128, 256]  expansion matrix, W2[l, 2l + c] = w_c
    # b2_ref: VMEM f32[1, 256]    interleaved bias row [b0, b1, b0, b1, ...]
    # x_ref : VMEM [tile_rows, 128]  lane-dense view of the batch
    # o_ref : VMEM [tile_rows, 256]  interleaved outputs; reshapes to [B, 2]
    x = x_ref[...].astype(jnp.float32)
    # One MXU matmul performs "expand each lane to two lanes and scale by
    # (w0, w1)" — i.e. the lane interleave.  Each W2 column has exactly one
    # nonzero, and HIGHEST precision keeps the product at f32 accuracy.
    # (This is layout plumbing, not a compute micro-opt: it stays far under
    # the HBM-bound budget on all generations.)
    z = jnp.dot(
        x,
        w2_ref[...],
        preferred_element_type=jnp.float32,
        precision=jax.lax.Precision.HIGHEST,
    )
    o_ref[...] = (z + b2_ref[...]).astype(o_ref.dtype)


def one_linear_forward(x, weight, bias, *, force_pallas=False):
    """Forward of torch.nn.Linear(1, 2): y[b, c] = x[b, 0] * w[c, 0] + b[c].

    x: [B, 1], weight: [2, 1] (torch layout), bias: [2].  Returns [B, 2].
    """
    B = x.shape[0]
    assert x.shape == (B, 1), "expected input of shape [batch, 1]"
    out_dtype = x.dtype

    w_row = weight.reshape(1, 2).astype(jnp.float32)   # [w0, w1]
    b_row = bias.reshape(1, 2).astype(jnp.float32)     # [b0, b1]

    # Small batches: one fused broadcast-FMA beats any kernel launch.
    if not force_pallas and B < _PALLAS_MIN_BATCH:
        y = x.astype(jnp.float32) * w_row + b_row
        return y.astype(out_dtype)

    xf = x.reshape(B)
    if B % _LANES == 0 and B >= _MIN_SLAB:
        b_pad = B                                  # zero-copy slab view
    else:
        # Ragged / tiny batch: pad only the flat tail (<= 1023 elements of
        # padding).  This is the only case that materializes a copy of x.
        b_pad = max(_round_up(B, _MIN_SLAB), _MIN_SLAB)
        xf = jnp.pad(xf, (0, b_pad - B))
    r = b_pad // _LANES
    x_slab = xf.reshape(r, _LANES)

    # Big tiles amortize the per-step overhead; keep the grid length >= 2 for
    # large batches so "parallel" can shard across both v7x TensorCores.
    tile_rows = min(_MAX_TILE_ROWS, _round_up(pl.cdiv(r, 2), 8))
    grid = pl.cdiv(r, tile_rows)   # last block may overhang; Pallas masks it

    # Constant operands.  W2[l, 2l + c] = w_c (one nonzero per column);
    # b2[0, 2m + c] = b_c.
    w2 = jnp.kron(jnp.eye(_LANES, dtype=jnp.float32), w_row)   # (128, 256)
    b2 = jnp.tile(b_row, (1, _LANES))                          # (1, 256)

    out = pl.pallas_call(
        _linear_kernel,
        out_shape=jax.ShapeDtypeStruct((r, _OUT_LANES), out_dtype),
        grid=(grid,),
        in_specs=[
            pl.BlockSpec((_LANES, _OUT_LANES), lambda i: (0, 0)),   # W2 (resident)
            pl.BlockSpec((1, _OUT_LANES), lambda i: (0, 0)),        # bias row
            pl.BlockSpec((tile_rows, _LANES), lambda i: (i, 0)),    # x slab tile
        ],
        out_specs=pl.BlockSpec((tile_rows, _OUT_LANES), lambda i: (i, 0)),
        compiler_params=pltpu.CompilerParams(
            dimension_semantics=("parallel",),
        ),
    )(w2, b2, x_slab)

    # (r, 256) -> (b_pad, 2) is a pure row-major reshape — no transpose pass.
    y = out.reshape(b_pad, 2)
    if b_pad != B:
        y = y[:B]
    return y


if __name__ == "__main__":
    param_value = 0.5   # OneLinearModule fills every parameter with this value

    # torch.nn.Linear(1, 2): weight [2, 1], bias [2], all == param_value.
    weight = jnp.full((2, 1), param_value, dtype=jnp.float32)
    bias = jnp.full((2,), param_value, dtype=jnp.float32)

    def reference(x):
        # Exact elementwise reference (no dot -> no TPU matmul rounding).
        return x * weight.reshape(1, 2) + bias.reshape(1, 2)

    key = jax.random.PRNGKey(0)
    k1, k2, k3 = jax.random.split(key, 3)

    # 1) Small shape consistent with the module (batch=8, in_features=1);
    #    force the Pallas path so the kernel itself runs at small shape.
    x_small = jax.random.normal(k1, (8, 1), dtype=jnp.float32)
    y_small = jax.block_until_ready(
        one_linear_forward(x_small, weight, bias, force_pallas=True))
    assert y_small.shape == (8, 2)
    assert jnp.allclose(y_small, reference(x_small), atol=1e-5, rtol=1e-5)

    # 2) 128-aligned batch: zero-copy slab path, multi-step grid (2 tiles).
    x_mid = jax.random.normal(k2, (2048, 1), dtype=jnp.float32)
    y_mid = jax.block_until_ready(
        one_linear_forward(x_mid, weight, bias, force_pallas=True))
    assert y_mid.shape == (2048, 2)
    assert jnp.allclose(y_mid, reference(x_mid), atol=1e-5, rtol=1e-5)

    # 3) 128-aligned but tile-ragged batch (r=20 rows, tile_rows=16, grid=2):
    #    exercises the masked overhang of the final grid block.
    x_rag = jax.random.normal(k3, (2560, 1), dtype=jnp.float32)
    y_rag = jax.block_until_ready(
        one_linear_forward(x_rag, weight, bias, force_pallas=True))
    assert y_rag.shape == (2560, 2)
    assert jnp.allclose(y_rag, reference(x_rag), atol=1e-5, rtol=1e-5)

    # 4) Small-batch fallback path (no kernel launch).
    y_fb = jax.block_until_ready(one_linear_forward(x_small, weight, bias))
    assert y_fb.shape == (8, 2)
    assert jnp.allclose(y_fb, reference(x_small), atol=1e-6, rtol=1e-6)

    print("KERNEL_OK")
</pallas_src>

<mosaic_0001>
module attributes {stable_mosaic.version = 11 : i64} {
  func.func @_linear_kernel(%arg0: i32, %arg1: memref<128x256xf32, #tpu.memory_space<vmem>>, %arg2: memref<1x256xf32, #tpu.memory_space<vmem>>, %arg3: memref<8x128xf32, #tpu.memory_space<vmem>>, %arg4: memref<8x256xf32, #tpu.memory_space<vmem>>) attributes {dimension_semantics = [#tpu.dimension_semantics<parallel>], iteration_bounds = array<i64: 1>, scalar_prefetch = 0 : i64, scratch_operands = 0 : i64, tpu.core_type = #tpu.core_type<tc>, window_params = [{pipeline_mode = #tpu.pipeline_mode<synchronous>, transform_indices = @transform_0, window_bounds = array<i64: 128, 256>}, {pipeline_mode = #tpu.pipeline_mode<synchronous>, transform_indices = @transform_1, window_bounds = array<i64: 1, 256>}, {transform_indices = @transform_2, window_bounds = array<i64: 8, 128>}, {transform_indices = @transform_3, window_bounds = array<i64: 8, 256>}]} {
    %c0 = arith.constant 0 : index
    %c0_0 = arith.constant 0 : index
    %0 = vector.load %arg3[%c0, %c0_0] : memref<8x128xf32, #tpu.memory_space<vmem>>, vector<8x128xf32>
    %c0_1 = arith.constant 0 : index
    %c0_2 = arith.constant 0 : index
    %1 = vector.load %arg1[%c0_1, %c0_2] : memref<128x256xf32, #tpu.memory_space<vmem>>, vector<128x256xf32>
    %cst = arith.constant dense<0.000000e+00> : vector<8x256xf32>
    %2 = tpu.matmul %0, %1, %cst {dimension_numbers = #tpu.dot_dimension_numbers<[1], [0], [0], [1], [0, 0, 1, 1], [], []>, precision = #tpu.contract_precision<fp32>} : vector<8x128xf32>, vector<128x256xf32>, vector<8x256xf32> -> vector<8x256xf32>
    %c0_3 = arith.constant 0 : index
    %c0_4 = arith.constant 0 : index
    %3 = vector.load %arg2[%c0_3, %c0_4] : memref<1x256xf32, #tpu.memory_space<vmem>>, vector<1x256xf32>
    %4 = vector.broadcast %3 : vector<1x256xf32> to vector<8x256xf32>
    %5 = arith.addf %2, %4 : vector<8x256xf32>
    %c0_5 = arith.constant 0 : index
    %c0_6 = arith.constant 0 : index
    %6 = vector.load %arg4[%c0_5, %c0_6] : memref<8x256xf32, #tpu.memory_space<vmem>>, vector<8x256xf32>
    tpu.vector_store %arg4[%c0_5, %c0_6], %5 {strides = array<i32>} : memref<8x256xf32, #tpu.memory_space<vmem>>, vector<8x256xf32>,
    return
  }
  func.func @transform_0(%arg0: i32) -> (i32, i32) {
    %c0_i32 = arith.constant 0 : i32
    %c0_i32_0 = arith.constant 0 : i32
    %c0_i32_1 = arith.constant 0 : i32
    return %c0_i32, %c0_i32_0 : i32, i32
  }
  func.func @transform_1(%arg0: i32) -> (i32, i32) {
    %c0_i32 = arith.constant 0 : i32
    %c0_i32_0 = arith.constant 0 : i32
    %c0_i32_1 = arith.constant 0 : i32
    return %c0_i32, %c0_i32_0 : i32, i32
  }
  func.func @transform_2(%arg0: i32) -> (i32, i32) {
    %c0_i32 = arith.constant 0 : i32
    %c0_i32_0 = arith.constant 0 : i32
    return %arg0, %c0_i32 : i32, i32
  }
  func.func @transform_3(%arg0: i32) -> (i32, i32) {
    %c0_i32 = arith.constant 0 : i32
    %c0_i32_0 = arith.constant 0 : i32
    return %arg0, %c0_i32 : i32, i32
  }
}

</mosaic_0001>

<llo_original>
// kernel: tpu_custom_call.1
$region0: #{tpu_custom_call.1}
  #allocation0 [shape = 'u32[]', space=smem, size = 0x4, offset = 0x4, fixed_abs, tag = 'smem constant byte address 0x4 - core index']
  #allocation1 [shape = 'u32[144,128]{1,0:T(1,128)}', space=vmem, size = 0x12000, scoped, tag = 'internal scratch']
  %s0 = inlined_call_operand.hbm [shape: f32[128,256], index: 0, kind: input, shape index: {}]
  %s1 = inlined_call_operand.vmem [shape: f32[1,256], index: 1, kind: input, shape index: {}]
  %s2 = inlined_call_operand.hbm [shape: f32[8,128], index: 2, kind: input, shape index: {}]
  %s3 = inlined_call_operand.hbm [shape: f32[8,256], index: 3, kind: output, shape index: {}]
  %s4 = sld [smem:[#allocation0]]
  $region30: #{tpu_custom_call.1} parent=0
    _
  %s6 = ssub.s32 1, %s4
  %s7 = scalar_select 0, %s6, %s4
  $region1: #{tpu_custom_call.1} parent=0
    #allocation2 [shape = 'u8[131072]{0}', space=vmem, size = 0x20000, scoped, tag = 'input window, operand 0, single buffered']
    #allocation3 [shape = 's32[1]{0}', space=sflag, size = 0x4, scoped, tag = 'scoped memory for tpu_custom_call.1']
    #allocation4 [shape = 's32[1]{0}', space=sflag, size = 0x4, scoped, tag = 'scoped memory for tpu_custom_call.1']
    #allocation5 [shape = 'u8[4096]{0}', space=vmem, size = 0x1000, scoped, tag = 'input window, operand 2, single buffered']
    #allocation6 [shape = 's32[1]{0}', space=sflag, size = 0x4, scoped, tag = 'scoped memory for tpu_custom_call.1']
    #allocation7 [shape = 'u8[8192]{0}', space=vmem, size = 0x2000, scoped, tag = 'output window, operand 0, single buffered']
    %8 = vsyncpa [#allocation3], 0
    %9 = vsyncpa [#allocation6], 0
    %10 = vsyncpa [#allocation4], 0
    // Predicated region
    $region2: #{tpu_custom_call.1} parent=1 // pred_check
      _
    $region3: #{tpu_custom_call.1} parent=1 // pred_check_branch
      %12 = sbr.rel (0) target = $region5
    $region4: #{tpu_custom_call.1} parent=1 // pred_region
      %s14 = ssub.s32 4096, 4096
      %15 = vsyncadd [#allocation3], %s14
      %s16 = sshll.u32 [#allocation2], 4
      %s17 = int_to_ptr.vmem [resolvable:$true] %s16
      %22 = dma.hbm_to_vmem [thread:$0]  %s0, 4096, %s17, [#allocation3], 256, 256, 16
    $region5: #{tpu_custom_call.1} parent=1 // pred_fallthru
      _
    // Predicated region
    $region6: #{tpu_custom_call.1} parent=1 // pred_check
      _
    $region7: #{tpu_custom_call.1} parent=1 // pred_check_branch
      %24 = sbr.rel (0) target = $region9
    $region8: #{tpu_custom_call.1} parent=1 // pred_region
      _
    $region9: #{tpu_custom_call.1} parent=1 // pred_fallthru
      _
    // Predicated region
    $region10: #{tpu_custom_call.1} parent=1 // pred_check
      _
    $region11: #{tpu_custom_call.1} parent=1 // pred_check_branch
      %26 = sbr.rel (0) target = $region13
    $region12: #{tpu_custom_call.1} parent=1 // pred_region
      %s28 = ssub.s32 128, 128
      %29 = vsyncadd [#allocation6], %s28
      %s31 = sshll.u32 [#allocation5], 4
      %s32 = int_to_ptr.vmem [resolvable:$true] %s31
      %34 = dma.hbm_to_vmem [thread:$0]  %s2, 128, %s32, [#allocation6]
    $region13: #{tpu_custom_call.1} parent=1 // pred_fallthru
      _
    // Predicated region
    $region14: #{tpu_custom_call.1} parent=1 // pred_check
      _
    $region15: #{tpu_custom_call.1} parent=1 // pred_check_branch
      %36 = sbr.rel (0) target = $region17
    $region16: #{tpu_custom_call.1} parent=1 // pred_region
      %37 = dma.done [#allocation3], 4096
    $region17: #{tpu_custom_call.1} parent=1 // pred_fallthru
      _
    // Predicated region
    $region18: #{tpu_custom_call.1} parent=1 // pred_check
      _
    $region19: #{tpu_custom_call.1} parent=1 // pred_check_branch
      %39 = sbr.rel (0) target = $region21
    $region20: #{tpu_custom_call.1} parent=1 // pred_region
      %40 = dma.done [#allocation6], 128
    $region21: #{tpu_custom_call.1} parent=1 // pred_fallthru
      _
    %v41 = vld [vmem:[#allocation5] sm:$0xff]
    %v42 = vld [vmem:[#allocation2] sm:$0xff]
    %v43 = vld [vmem:[#allocation2 + $0x8] sm:$0xff]
    %v44 = vld [vmem:[#allocation2 + $0x10] sm:$0xff]
    %v45 = vld [vmem:[#allocation2 + $0x18] sm:$0xff]
    %v46 = vld [vmem:[#allocation2 + $0x20] sm:$0xff]
    %v47 = vld [vmem:[#allocation2 + $0x28] sm:$0xff]
    %v48 = vld [vmem:[#allocation2 + $0x30] sm:$0xff]
    %v49 = vld [vmem:[#allocation2 + $0x38] sm:$0xff]
    %v50 = vld [vmem:[#allocation2 + $0x40] sm:$0xff]
    %v51 = vld [vmem:[#allocation2 + $0x48] sm:$0xff]
    %v52 = vld [vmem:[#allocation2 + $0x50] sm:$0xff]
    %v53 = vld [vmem:[#allocation2 + $0x58] sm:$0xff]
    %v54 = vld [vmem:[#allocation2 + $0x60] sm:$0xff]
    %v55 = vld [vmem:[#allocation2 + $0x68] sm:$0xff]
    %v56 = vld [vmem:[#allocation2 + $0x70] sm:$0xff]
    %v57 = vld [vmem:[#allocation2 + $0x78] sm:$0xff]
    %v58 = vld [vmem:[#allocation2 + $0x80] sm:$0xff]
    %v59 = vld [vmem:[#allocation2 + $0x88] sm:$0xff]
    %v60 = vld [vmem:[#allocation2 + $0x90] sm:$0xff]
    %v61 = vld [vmem:[#allocation2 + $0x98] sm:$0xff]
    %v62 = vld [vmem:[#allocation2 + $0xa0] sm:$0xff]
    %v63 = vld [vmem:[#allocation2 + $0xa8] sm:$0xff]
    %v64 = vld [vmem:[#allocation2 + $0xb0] sm:$0xff]
    %v65 = vld [vmem:[#allocation2 + $0xb8] sm:$0xff]
    %v66 = vld [vmem:[#allocation2 + $0xc0] sm:$0xff]
    %v67 = vld [vmem:[#allocation2 + $0xc8] sm:$0xff]
    %v68 = vld [vmem:[#allocation2 + $0xd0] sm:$0xff]
    %v69 = vld [vmem:[#allocation2 + $0xd8] sm:$0xff]
    %v70 = vld [vmem:[#allocation2 + $0xe0] sm:$0xff]
    %v71 = vld [vmem:[#allocation2 + $0xe8] sm:$0xff]
    %v72 = vld [vmem:[#allocation2 + $0xf0] sm:$0xff]
    %v73 = vld [vmem:[#allocation2 + $0xf8] sm:$0xff]
    %v74 = vld [vmem:[%s1] sm:$0x3]
    %v76 = vlaneseq
    %v77 = vshrl.u32 %v76, 7
    %v78 = vsub.s32 0, %v77
    %v79 = vrot.slane %v74, %v78
    %v80 = vlaneseq
    %v81 = vshrl.u32 %v80, 7
    %v82 = vsub.s32 1, %v81
    %v83 = vrot.slane %v74, %v82
    %v86 = vand.u32 %v43, 4294901760
    %87 = vmatprep.subr.mxu0 %v86
    %v88 = vand.u32 %v42, 4294901760
    %89 = vmatpush1.msra.mxu0 %v88
    %v90 = vand.u32 %v45, 4294901760
    %91 = vmatprep.subr.mxu0 %v90
    %v92 = vand.u32 %v44, 4294901760
    %93 = vmatpush1.msra.mxu0 %v92
    %v94 = vand.u32 %v47, 4294901760
    %95 = vmatprep.subr.mxu0 %v94
    %v96 = vand.u32 %v46, 4294901760
    %97 = vmatpush1.msra.mxu0 %v96
    %v98 = vand.u32 %v49, 4294901760
    %99 = vmatprep.subr.mxu0 %v98
    %v100 = vand.u32 %v48, 4294901760
    %101 = vmatpush1.msra.mxu0 %v100
    %v102 = vand.u32 %v51, 4294901760
    %103 = vmatprep.subr.mxu0 %v102
    %v104 = vand.u32 %v50, 4294901760
    %105 = vmatpush1.msra.mxu0 %v104
    %v106 = vand.u32 %v53, 4294901760
    %107 = vmatprep.subr.mxu0 %v106
    %v108 = vand.u32 %v52, 4294901760
    %109 = vmatpush1.msra.mxu0 %v108
    %v110 = vand.u32 %v55, 4294901760
    %111 = vmatprep.subr.mxu0 %v110
    %v112 = vand.u32 %v54, 4294901760
    %113 = vmatpush1.msra.mxu0 %v112
    %v114 = vand.u32 %v57, 4294901760
    %115 = vmatprep.subr.mxu0 %v114
    %v116 = vand.u32 %v56, 4294901760
    %117 = vmatpush1.msra.mxu0 %v116
    %v118 = vand.u32 %v59, 4294901760
    %119 = vmatprep.subr.mxu0 %v118
    %v120 = vand.u32 %v58, 4294901760
    %121 = vmatpush1.msra.mxu0 %v120
    %v122 = vand.u32 %v61, 4294901760
    %123 = vmatprep.subr.mxu0 %v122
    %v124 = vand.u32 %v60, 4294901760
    %125 = vmatpush1.msra.mxu0 %v124
    %v126 = vand.u32 %v63, 4294901760
    %127 = vmatprep.subr.mxu0 %v126
    %v128 = vand.u32 %v62, 4294901760
    %129 = vmatpush1.msra.mxu0 %v128
    %v130 = vand.u32 %v65, 4294901760
    %131 = vmatprep.subr.mxu0 %v130
    %v132 = vand.u32 %v64, 4294901760
    %133 = vmatpush1.msra.mxu0 %v132
    %v134 = vand.u32 %v67, 4294901760
    %135 = vmatprep.subr.mxu0 %v134
    %v136 = vand.u32 %v66, 4294901760
    %137 = vmatpush1.msra.mxu0 %v136
    %v138 = vand.u32 %v69, 4294901760
    %139 = vmatprep.subr.mxu0 %v138
    %v140 = vand.u32 %v68, 4294901760
    %141 = vmatpush1.msra.mxu0 %v140
    %v142 = vand.u32 %v71, 4294901760
    %143 = vmatprep.subr.mxu0 %v142
    %v144 = vand.u32 %v70, 4294901760
    %145 = vmatpush1.msra.mxu0 %v144
    %v146 = vand.u32 %v73, 4294901760
    %147 = vmatprep.subr.mxu0 %v146
    %v148 = vand.u32 %v72, 4294901760
    %149 = vmatpush1.msra.mxu0 %v148
    %150 = vmatprep.subr.mxu0 0.0
    %151 = vmatpush1.msra.mxu0 0.0
    %152 = vmatprep.subr.mxu0 0.0
    %153 = vmatpush1.msra.mxu0 0.0
    %154 = vmatprep.subr.mxu0 0.0
    %155 = vmatpush1.msra.mxu0 0.0
    %156 = vmatprep.subr.mxu0 0.0
    %157 = vmatpush1.msra.mxu0 0.0
    %158 = vmatprep.subr.mxu0 0.0
    %159 = vmatpush1.msra.mxu0 0.0
    %160 = vmatprep.subr.mxu0 0.0
    %161 = vmatpush1.msra.mxu0 0.0
    %162 = vmatprep.subr.mxu0 0.0
    %163 = vmatpush1.msra.mxu0 0.0
    %164 = vmatprep.subr.mxu0 0.0
    %165 = vmatpush1.msra.mxu0 0.0
    %166 = vmatprep.subr.mxu0 0.0
    %167 = vmatpush1.msra.mxu0 0.0
    %168 = vmatprep.subr.mxu0 0.0
    %169 = vmatpush1.msra.mxu0 0.0
    %170 = vmatprep.subr.mxu0 0.0
    %171 = vmatpush1.msra.mxu0 0.0
    %172 = vmatprep.subr.mxu0 0.0
    %173 = vmatpush1.msra.mxu0 0.0
    %174 = vmatprep.subr.mxu0 0.0
    %175 = vmatpush1.msra.mxu0 0.0
    %176 = vmatprep.subr.mxu0 0.0
    %177 = vmatpush1.msra.mxu0 0.0
    %178 = vmatprep.subr.mxu0 0.0
    %179 = vmatpush1.msra.mxu0 0.0
    %180 = vmatprep.subr.mxu0 0.0
    %181 = vmatpush1.msra.mxu0 0.0
    %182 = vmatprep.mubr.f32.mxu0 0.0
    %v183 = vand.u32 %v41, 4294901760
    %v184 = vsub.f32 %v41, %v183
    %v185 = vand.u32 %v184, 4294901760
    %v186 = vsub.f32 %v184, %v185
    %v187 = vand.u32 %v186, 4294901760
    %188 = vmatmul.mubr.f32.gmra.mrb[0].mxu0 %v187
    %v189 = vpop.f32.mrb[0].mxu0
    %v190 = vadd.f32 %v79, %v189
    %v191 = vpop.f32.mrb[0].mxu0
    %v192 = vadd.f32 %v83, %v191
    %193 = vdwg.mxu0
    %v194 = vand.u32 %v43, 4294901760
    %v195 = vsub.f32 %v43, %v194
    %v196 = vand.u32 %v195, 4294901760
    %v197 = vsub.f32 %v195, %v196
    %v198 = vand.u32 %v197, 4294901760
    %199 = vmatprep.subr.mxu0 %v198
    %v200 = vand.u32 %v42, 4294901760
    %v201 = vsub.f32 %v42, %v200
    %v202 = vand.u32 %v201, 4294901760
    %v203 = vsub.f32 %v201, %v202
    %v204 = vand.u32 %v203, 4294901760
    %205 = vmatpush1.msra.mxu0 %v204
    %v206 = vand.u32 %v45, 4294901760
    %v207 = vsub.f32 %v45, %v206
    %v208 = vand.u32 %v207, 4294901760
    %v209 = vsub.f32 %v207, %v208
    %v210 = vand.u32 %v209, 4294901760
    %211 = vmatprep.subr.mxu0 %v210
    %v212 = vand.u32 %v44, 4294901760
    %v213 = vsub.f32 %v44, %v212
    %v214 = vand.u32 %v213, 4294901760
    %v215 = vsub.f32 %v213, %v214
    %v216 = vand.u32 %v215, 4294901760
    %217 = vmatpush1.msra.mxu0 %v216
    %v218 = vand.u32 %v47, 4294901760
    %v219 = vsub.f32 %v47, %v218
    %v220 = vand.u32 %v219, 4294901760
    %v221 = vsub.f32 %v219, %v220
    %v222 = vand.u32 %v221, 4294901760
    %223 = vmatprep.subr.mxu0 %v222
    %v224 = vand.u32 %v46, 4294901760
    %v225 = vsub.f32 %v46, %v224
    %v226 = vand.u32 %v225, 4294901760
    %v227 = vsub.f32 %v225, %v226
    %v228 = vand.u32 %v227, 4294901760
    %229 = vmatpush1.msra.mxu0 %v228
    %v230 = vand.u32 %v49, 4294901760
    %v231 = vsub.f32 %v49, %v230
    %v232 = vand.u32 %v231, 4294901760
    %v233 = vsub.f32 %v231, %v232
    %v234 = vand.u32 %v233, 4294901760
    %235 = vmatprep.subr.mxu0 %v234
    %v236 = vand.u32 %v48, 4294901760
    %v237 = vsub.f32 %v48, %v236
    %v238 = vand.u32 %v237, 4294901760
    %v239 = vsub.f32 %v237, %v238
    %v240 = vand.u32 %v239, 4294901760
    %241 = vmatpush1.msra.mxu0 %v240
    %v242 = vand.u32 %v51, 4294901760
    %v243 = vsub.f32 %v51, %v242
    %v244 = vand.u32 %v243, 4294901760
    %v245 = vsub.f32 %v243, %v244
    %v246 = vand.u32 %v245, 4294901760
    %247 = vmatprep.subr.mxu0 %v246
    %v248 = vand.u32 %v50, 4294901760
    %v249 = vsub.f32 %v50, %v248
    %v250 = vand.u32 %v249, 4294901760
    %v251 = vsub.f32 %v249, %v250
    %v252 = vand.u32 %v251, 4294901760
    %253 = vmatpush1.msra.mxu0 %v252
    %v254 = vand.u32 %v53, 4294901760
    %v255 = vsub.f32 %v53, %v254
    %v256 = vand.u32 %v255, 4294901760
    %v257 = vsub.f32 %v255, %v256
    %v258 = vand.u32 %v257, 4294901760
    %259 = vmatprep.subr.mxu0 %v258
    %v260 = vand.u32 %v52, 4294901760
    %v261 = vsub.f32 %v52, %v260
    %v262 = vand.u32 %v261, 4294901760
    %v263 = vsub.f32 %v261, %v262
    %v264 = vand.u32 %v263, 4294901760
    %265 = vmatpush1.msra.mxu0 %v264
    %v266 = vand.u32 %v55, 4294901760
    %v267 = vsub.f32 %v55, %v266
    %v268 = vand.u32 %v267, 4294901760
    %v269 = vsub.f32 %v267, %v268
    %v270 = vand.u32 %v269, 4294901760
    %271 = vmatprep.subr.mxu0 %v270
    %v272 = vand.u32 %v54, 4294901760
    %v273 = vsub.f32 %v54, %v272
    %v274 = vand.u32 %v273, 4294901760
    %v275 = vsub.f32 %v273, %v274
    %v276 = vand.u32 %v275, 4294901760
    %277 = vmatpush1.msra.mxu0 %v276
    %v278 = vand.u32 %v57, 4294901760
    %v279 = vsub.f32 %v57, %v278
    %v280 = vand.u32 %v279, 4294901760
    %v281 = vsub.f32 %v279, %v280
    %v282 = vand.u32 %v281, 4294901760
    %283 = vmatprep.subr.mxu0 %v282
    %v284 = vand.u32 %v56, 4294901760
    %v285 = vsub.f32 %v56, %v284
    %v286 = vand.u32 %v285, 4294901760
    %v287 = vsub.f32 %v285, %v286
    %v288 = vand.u32 %v287, 4294901760
    %289 = vmatpush1.msra.mxu0 %v288
    %v290 = vand.u32 %v59, 4294901760
    %v291 = vsub.f32 %v59, %v290
    %v292 = vand.u32 %v291, 4294901760
    %v293 = vsub.f32 %v291, %v292
    %v294 = vand.u32 %v293, 4294901760
    %295 = vmatprep.subr.mxu0 %v294
    %v296 = vand.u32 %v58, 4294901760
    %v297 = vsub.f32 %v58, %v296
    %v298 = vand.u32 %v297, 4294901760
    %v299 = vsub.f32 %v297, %v298
    %v300 = vand.u32 %v299, 4294901760
    %301 = vmatpush1.msra.mxu0 %v300
    %v302 = vand.u32 %v61, 4294901760
    %v303 = vsub.f32 %v61, %v302
    %v304 = vand.u32 %v303, 4294901760
    %v305 = vsub.f32 %v303, %v304
    %v306 = vand.u32 %v305, 4294901760
    %307 = vmatprep.subr.mxu0 %v306
    %v308 = vand.u32 %v60, 4294901760
    %v309 = vsub.f32 %v60, %v308
    %v310 = vand.u32 %v309, 4294901760
    %v311 = vsub.f32 %v309, %v310
    %v312 = vand.u32 %v311, 4294901760
    %313 = vmatpush1.msra.mxu0 %v312
    %v314 = vand.u32 %v63, 4294901760
    %v315 = vsub.f32 %v63, %v314
    %v316 = vand.u32 %v315, 4294901760
    %v317 = vsub.f32 %v315, %v316
    %v318 = vand.u32 %v317, 4294901760
    %319 = vmatprep.subr.mxu0 %v318
    %v320 = vand.u32 %v62, 4294901760
    %v321 = vsub.f32 %v62, %v320
    %v322 = vand.u32 %v321, 4294901760
    %v323 = vsub.f32 %v321, %v322
    %v324 = vand.u32 %v323, 4294901760
    %325 = vmatpush1.msra.mxu0 %v324
    %v326 = vand.u32 %v65, 4294901760
    %v327 = vsub.f32 %v65, %v326
    %v328 = vand.u32 %v327, 4294901760
    %v329 = vsub.f32 %v327, %v328
    %v330 = vand.u32 %v329, 4294901760
    %331 = vmatprep.subr.mxu0 %v330
    %v332 = vand.u32 %v64, 4294901760
    %v333 = vsub.f32 %v64, %v332
    %v334 = vand.u32 %v333, 4294901760
    %v335 = vsub.f32 %v333, %v334
    %v336 = vand.u32 %v335, 4294901760
    %337 = vmatpush1.msra.mxu0 %v336
    %v338 = vand.u32 %v67, 4294901760
    %v339 = vsub.f32 %v67, %v338
    %v340 = vand.u32 %v339, 4294901760
    %v341 = vsub.f32 %v339, %v340
    %v342 = vand.u32 %v341, 4294901760
    %343 = vmatprep.subr.mxu0 %v342
    %v344 = vand.u32 %v66, 4294901760
    %v345 = vsub.f32 %v66, %v344
    %v346 = vand.u32 %v345, 4294901760
    %v347 = vsub.f32 %v345, %v346
    %v348 = vand.u32 %v347, 4294901760
    %349 = vmatpush1.msra.mxu0 %v348
    %v350 = vand.u32 %v69, 4294901760
    %v351 = vsub.f32 %v69, %v350
    %v352 = vand.u32 %v351, 4294901760
    %v353 = vsub.f32 %v351, %v352
    %v354 = vand.u32 %v353, 4294901760
    %355 = vmatprep.subr.mxu0 %v354
    %v356 = vand.u32 %v68, 4294901760
    %v357 = vsub.f32 %v68, %v356
    %v358 = vand.u32 %v357, 4294901760
    %v359 = vsub.f32 %v357, %v358
    %v360 = vand.u32 %v359, 4294901760
    %361 = vmatpush1.msra.mxu0 %v360
    %v362 = vand.u32 %v71, 4294901760
    %v363 = vsub.f32 %v71, %v362
    %v364 = vand.u32 %v363, 4294901760
    %v365 = vsub.f32 %v363, %v364
    %v366 = vand.u32 %v365, 4294901760
    %367 = vmatprep.subr.mxu0 %v366
    %v368 = vand.u32 %v70, 4294901760
    %v369 = vsub.f32 %v70, %v368
    %v370 = vand.u32 %v369, 4294901760
    %v371 = vsub.f32 %v369, %v370
    %v372 = vand.u32 %v371, 4294901760
    %373 = vmatpush1.msra.mxu0 %v372
    %v374 = vand.u32 %v73, 4294901760
    %v375 = vsub.f32 %v73, %v374
    %v376 = vand.u32 %v375, 4294901760
    %v377 = vsub.f32 %v375, %v376
    %v378 = vand.u32 %v377, 4294901760
    %379 = vmatprep.subr.mxu0 %v378
    %v380 = vand.u32 %v72, 4294901760
    %v381 = vsub.f32 %v72, %v380
    %v382 = vand.u32 %v381, 4294901760
    %v383 = vsub.f32 %v381, %v382
    %v384 = vand.u32 %v383, 4294901760
    %385 = vmatpush1.msra.mxu0 %v384
    %386 = vmatprep.subr.mxu0 0.0
    %387 = vmatpush1.msra.mxu0 0.0
    %388 = vmatprep.subr.mxu0 0.0
    %389 = vmatpush1.msra.mxu0 0.0
    %390 = vmatprep.subr.mxu0 0.0
    %391 = vmatpush1.msra.mxu0 0.0
    %392 = vmatprep.subr.mxu0 0.0
    %393 = vmatpush1.msra.mxu0 0.0
    %394 = vmatprep.subr.mxu0 0.0
    %395 = vmatpush1.msra.mxu0 0.0
    %396 = vmatprep.subr.mxu0 0.0
    %397 = vmatpush1.msra.mxu0 0.0
    %398 = vmatprep.subr.mxu0 0.0
    %399 = vmatpush1.msra.mxu0 0.0
    %400 = vmatprep.subr.mxu0 0.0
    %401 = vmatpush1.msra.mxu0 0.0
    %402 = vmatprep.subr.mxu0 0.0
    %403 = vmatpush1.msra.mxu0 0.0
    %404 = vmatprep.subr.mxu0 0.0
    %405 = vmatpush1.msra.mxu0 0.0
    %406 = vmatprep.subr.mxu0 0.0
    %407 = vmatpush1.msra.mxu0 0.0
    %408 = vmatprep.subr.mxu0 0.0
    %409 = vmatpush1.msra.mxu0 0.0
    %410 = vmatprep.subr.mxu0 0.0
    %411 = vmatpush1.msra.mxu0 0.0
    %412 = vmatprep.subr.mxu0 0.0
    %413 = vmatpush1.msra.mxu0 0.0
    %414 = vmatprep.subr.mxu0 0.0
    %415 = vmatpush1.msra.mxu0 0.0
    %416 = vmatprep.subr.mxu0 0.0
    %417 = vmatpush1.msra.mxu0 0.0
    %418 = vmatprep.mubr.f32.mxu0 0.0
    %v419 = vand.u32 %v41, 4294901760
    %420 = vmatmul.mubr.f32.gmra.mrb[0].mxu0 %v419
    %v421 = vpop.f32.mrb[0].mxu0
    %v422 = vadd.f32 %v190, %v421
    %v423 = vpop.f32.mrb[0].mxu0
    %v424 = vadd.f32 %v192, %v423
    %425 = vdwg.mxu0
    %v426 = vand.u32 %v43, 4294901760
    %v427 = vsub.f32 %v43, %v426
    %428 = vmatprep.subr.mxu0 %v427
    %v429 = vand.u32 %v42, 4294901760
    %v430 = vsub.f32 %v42, %v429
    %431 = vmatpush1.msra.mxu0 %v430
    %v432 = vand.u32 %v45, 4294901760
    %v433 = vsub.f32 %v45, %v432
    %434 = vmatprep.subr.mxu0 %v433
    %v435 = vand.u32 %v44, 4294901760
    %v436 = vsub.f32 %v44, %v435
    %437 = vmatpush1.msra.mxu0 %v436
    %v438 = vand.u32 %v47, 4294901760
    %v439 = vsub.f32 %v47, %v438
    %440 = vmatprep.subr.mxu0 %v439
    %v441 = vand.u32 %v46, 4294901760
    %v442 = vsub.f32 %v46, %v441
    %443 = vmatpush1.msra.mxu0 %v442
    %v444 = vand.u32 %v49, 4294901760
    %v445 = vsub.f32 %v49, %v444
    %446 = vmatprep.subr.mxu0 %v445
    %v447 = vand.u32 %v48, 4294901760
    %v448 = vsub.f32 %v48, %v447
    %449 = vmatpush1.msra.mxu0 %v448
    %v450 = vand.u32 %v51, 4294901760
    %v451 = vsub.f32 %v51, %v450
    %452 = vmatprep.subr.mxu0 %v451
    %v453 = vand.u32 %v50, 4294901760
    %v454 = vsub.f32 %v50, %v453
    %455 = vmatpush1.msra.mxu0 %v454
    %v456 = vand.u32 %v53, 4294901760
    %v457 = vsub.f32 %v53, %v456
    %458 = vmatprep.subr.mxu0 %v457
    %v459 = vand.u32 %v52, 4294901760
    %v460 = vsub.f32 %v52, %v459
    %461 = vmatpush1.msra.mxu0 %v460
    %v462 = vand.u32 %v55, 4294901760
    %v463 = vsub.f32 %v55, %v462
    %464 = vmatprep.subr.mxu0 %v463
    %v465 = vand.u32 %v54, 4294901760
    %v466 = vsub.f32 %v54, %v465
    %467 = vmatpush1.msra.mxu0 %v466
    %v468 = vand.u32 %v57, 4294901760
    %v469 = vsub.f32 %v57, %v468
    %470 = vmatprep.subr.mxu0 %v469
    %v471 = vand.u32 %v56, 4294901760
    %v472 = vsub.f32 %v56, %v471
    %473 = vmatpush1.msra.mxu0 %v472
    %v474 = vand.u32 %v59, 4294901760
    %v475 = vsub.f32 %v59, %v474
    %476 = vmatprep.subr.mxu0 %v475
    %v477 = vand.u32 %v58, 4294901760
    %v478 = vsub.f32 %v58, %v477
    %479 = vmatpush1.msra.mxu0 %v478
    %v480 = vand.u32 %v61, 4294901760
    %v481 = vsub.f32 %v61, %v480
    %482 = vmatprep.subr.mxu0 %v481
    %v483 = vand.u32 %v60, 4294901760
    %v484 = vsub.f32 %v60, %v483
    %485 = vmatpush1.msra.mxu0 %v484
    %v486 = vand.u32 %v63, 4294901760
    %v487 = vsub.f32 %v63, %v486
    %488 = vmatprep.subr.mxu0 %v487
    %v489 = vand.u32 %v62, 4294901760
    %v490 = vsub.f32 %v62, %v489
    %491 = vmatpush1.msra.mxu0 %v490
    %v492 = vand.u32 %v65, 4294901760
    %v493 = vsub.f32 %v65, %v492
    %494 = vmatprep.subr.mxu0 %v493
    %v495 = vand.u32 %v64, 4294901760
    %v496 = vsub.f32 %v64, %v495
    %497 = vmatpush1.msra.mxu0 %v496
    %v498 = vand.u32 %v67, 4294901760
    %v499 = vsub.f32 %v67, %v498
    %500 = vmatprep.subr.mxu0 %v499
    %v501 = vand.u32 %v66, 4294901760
    %v502 = vsub.f32 %v66, %v501
    %503 = vmatpush1.msra.mxu0 %v502
    %v504 = vand.u32 %v69, 4294901760
    %v505 = vsub.f32 %v69, %v504
    %506 = vmatprep.subr.mxu0 %v505
    %v507 = vand.u32 %v68, 4294901760
    %v508 = vsub.f32 %v68, %v507
    %509 = vmatpush1.msra.mxu0 %v508
    %v510 = vand.u32 %v71, 4294901760
    %v511 = vsub.f32 %v71, %v510
    %512 = vmatprep.subr.mxu0 %v511
    %v513 = vand.u32 %v70, 4294901760
    %v514 = vsub.f32 %v70, %v513
    %515 = vmatpush1.msra.mxu0 %v514
    %v516 = vand.u32 %v73, 4294901760
    %v517 = vsub.f32 %v73, %v516
    %518 = vmatprep.subr.mxu0 %v517
    %v519 = vand.u32 %v72, 4294901760
    %v520 = vsub.f32 %v72, %v519
    %521 = vmatpush1.msra.mxu0 %v520
    %522 = vmatprep.subr.mxu0 0.0
    %523 = vmatpush1.msra.mxu0 0.0
    %524 = vmatprep.subr.mxu0 0.0
    %525 = vmatpush1.msra.mxu0 0.0
    %526 = vmatprep.subr.mxu0 0.0
    %527 = vmatpush1.msra.mxu0 0.0
    %528 = vmatprep.subr.mxu0 0.0
    %529 = vmatpush1.msra.mxu0 0.0
    %530 = vmatprep.subr.mxu0 0.0
    %531 = vmatpush1.msra.mxu0 0.0
    %532 = vmatprep.subr.mxu0 0.0
    %533 = vmatpush1.msra.mxu0 0.0
    %534 = vmatprep.subr.mxu0 0.0
    %535 = vmatpush1.msra.mxu0 0.0
    %536 = vmatprep.subr.mxu0 0.0
    %537 = vmatpush1.msra.mxu0 0.0
    %538 = vmatprep.subr.mxu0 0.0
    %539 = vmatpush1.msra.mxu0 0.0
    %540 = vmatprep.subr.mxu0 0.0
    %541 = vmatpush1.msra.mxu0 0.0
    %542 = vmatprep.subr.mxu0 0.0
    %543 = vmatpush1.msra.mxu0 0.0
    %544 = vmatprep.subr.mxu0 0.0
    %545 = vmatpush1.msra.mxu0 0.0
    %546 = vmatprep.subr.mxu0 0.0
    %547 = vmatpush1.msra.mxu0 0.0
    %548 = vmatprep.subr.mxu0 0.0
    %549 = vmatpush1.msra.mxu0 0.0
    %550 = vmatprep.subr.mxu0 0.0
    %551 = vmatpush1.msra.mxu0 0.0
    %552 = vmatprep.subr.mxu0 0.0
    %553 = vmatpush1.msra.mxu0 0.0
    %554 = vmatprep.mubr.f32.mxu0 0.0
    %v555 = vand.u32 %v41, 4294901760
    %v556 = vsub.f32 %v41, %v555
    %557 = vmatmul.mubr.f32.gmra.mrb[0].mxu0 %v556
    %v558 = vpop.f32.mrb[0].mxu0
    %v559 = vadd.f32 %v422, %v558
    %v560 = vpop.f32.mrb[0].mxu0
    %v561 = vadd.f32 %v424, %v560
    %562 = vdwg.mxu0
    %v563 = vand.u32 %v43, 4294901760
    %564 = vmatprep.subr.mxu0 %v563
    %v565 = vand.u32 %v42, 4294901760
    %566 = vmatpush1.msra.mxu0 %v565
    %v567 = vand.u32 %v45, 4294901760
    %568 = vmatprep.subr.mxu0 %v567
    %v569 = vand.u32 %v44, 4294901760
    %570 = vmatpush1.msra.mxu0 %v569
    %v571 = vand.u32 %v47, 4294901760
    %572 = vmatprep.subr.mxu0 %v571
    %v573 = vand.u32 %v46, 4294901760
    %574 = vmatpush1.msra.mxu0 %v573
    %v575 = vand.u32 %v49, 4294901760
    %576 = vmatprep.subr.mxu0 %v575
    %v577 = vand.u32 %v48, 4294901760
    %578 = vmatpush1.msra.mxu0 %v577
    %v579 = vand.u32 %v51, 4294901760
    %580 = vmatprep.subr.mxu0 %v579
    %v581 = vand.u32 %v50, 4294901760
    %582 = vmatpush1.msra.mxu0 %v581
    %v583 = vand.u32 %v53, 4294901760
    %584 = vmatprep.subr.mxu0 %v583
    %v585 = vand.u32 %v52, 4294901760
    %586 = vmatpush1.msra.mxu0 %v585
    %v587 = vand.u32 %v55, 4294901760
    %588 = vmatprep.subr.mxu0 %v587
    %v589 = vand.u32 %v54, 4294901760
    %590 = vmatpush1.msra.mxu0 %v589
    %v591 = vand.u32 %v57, 4294901760
    %592 = vmatprep.subr.mxu0 %v591
    %v593 = vand.u32 %v56, 4294901760
    %594 = vmatpush1.msra.mxu0 %v593
    %v595 = vand.u32 %v59, 4294901760
    %596 = vmatprep.subr.mxu0 %v595
    %v597 = vand.u32 %v58, 4294901760
    %598 = vmatpush1.msra.mxu0 %v597
    %v599 = vand.u32 %v61, 4294901760
    %600 = vmatprep.subr.mxu0 %v599
    %v601 = vand.u32 %v60, 4294901760
    %602 = vmatpush1.msra.mxu0 %v601
    %v603 = vand.u32 %v63, 4294901760
    %604 = vmatprep.subr.mxu0 %v603
    %v605 = vand.u32 %v62, 4294901760
    %606 = vmatpush1.msra.mxu0 %v605
    %v607 = vand.u32 %v65, 4294901760
    %608 = vmatprep.subr.mxu0 %v607
    %v609 = vand.u32 %v64, 4294901760
    %610 = vmatpush1.msra.mxu0 %v609
    %v611 = vand.u32 %v67, 4294901760
    %612 = vmatprep.subr.mxu0 %v611
    %v613 = vand.u32 %v66, 4294901760
    %614 = vmatpush1.msra.mxu0 %v613
    %v615 = vand.u32 %v69, 4294901760
    %616 = vmatprep.subr.mxu0 %v615
    %v617 = vand.u32 %v68, 4294901760
    %618 = vmatpush1.msra.mxu0 %v617
    %v619 = vand.u32 %v71, 4294901760
    %620 = vmatprep.subr.mxu0 %v619
    %v621 = vand.u32 %v70, 4294901760
    %622 = vmatpush1.msra.mxu0 %v621
    %v623 = vand.u32 %v73, 4294901760
    %624 = vmatprep.subr.mxu0 %v623
    %v625 = vand.u32 %v72, 4294901760
    %626 = vmatpush1.msra.mxu0 %v625
    %627 = vmatprep.subr.mxu0 0.0
    %628 = vmatpush1.msra.mxu0 0.0
    %629 = vmatprep.subr.mxu0 0.0
    %630 = vmatpush1.msra.mxu0 0.0
    %631 = vmatprep.subr.mxu0 0.0
    %632 = vmatpush1.msra.mxu0 0.0
    %633 = vmatprep.subr.mxu0 0.0
    %634 = vmatpush1.msra.mxu0 0.0
    %635 = vmatprep.subr.mxu0 0.0
    %636 = vmatpush1.msra.mxu0 0.0
    %637 = vmatprep.subr.mxu0 0.0
    %638 = vmatpush1.msra.mxu0 0.0
    %639 = vmatprep.subr.mxu0 0.0
    %640 = vmatpush1.msra.mxu0 0.0
    %641 = vmatprep.subr.mxu0 0.0
    %642 = vmatpush1.msra.mxu0 0.0
    %643 = vmatprep.subr.mxu0 0.0
    %644 = vmatpush1.msra.mxu0 0.0
    %645 = vmatprep.subr.mxu0 0.0
    %646 = vmatpush1.msra.mxu0 0.0
    %647 = vmatprep.subr.mxu0 0.0
    %648 = vmatpush1.msra.mxu0 0.0
    %649 = vmatprep.subr.mxu0 0.0
    %650 = vmatpush1.msra.mxu0 0.0
    %651 = vmatprep.subr.mxu0 0.0
    %652 = vmatpush1.msra.mxu0 0.0
    %653 = vmatprep.subr.mxu0 0.0
    %654 = vmatpush1.msra.mxu0 0.0
    %655 = vmatprep.subr.mxu0 0.0
    %656 = vmatpush1.msra.mxu0 0.0
    %657 = vmatprep.subr.mxu0 0.0
    %658 = vmatpush1.msra.mxu0 0.0
    %659 = vmatprep.mubr.f32.mxu0 0.0
    %v660 = vand.u32 %v41, 4294901760
    %v661 = vsub.f32 %v41, %v660
    %v662 = vand.u32 %v661, 4294901760
    %663 = vmatmul.mubr.f32.gmra.mrb[0].mxu0 %v662
    %v664 = vpop.f32.mrb[0].mxu0
    %v665 = vadd.f32 %v559, %v664
    %v666 = vpop.f32.mrb[0].mxu0
    %v667 = vadd.f32 %v561, %v666
    %668 = vdwg.mxu0
    %v669 = vand.u32 %v43, 4294901760
    %v670 = vsub.f32 %v43, %v669
    %v671 = vand.u32 %v670, 4294901760
    %672 = vmatprep.subr.mxu0 %v671
    %v673 = vand.u32 %v42, 4294901760
    %v674 = vsub.f32 %v42, %v673
    %v675 = vand.u32 %v674, 4294901760
    %676 = vmatpush1.msra.mxu0 %v675
    %v677 = vand.u32 %v45, 4294901760
    %v678 = vsub.f32 %v45, %v677
    %v679 = vand.u32 %v678, 4294901760
    %680 = vmatprep.subr.mxu0 %v679
    %v681 = vand.u32 %v44, 4294901760
    %v682 = vsub.f32 %v44, %v681
    %v683 = vand.u32 %v682, 4294901760
    %684 = vmatpush1.msra.mxu0 %v683
    %v685 = vand.u32 %v47, 4294901760
    %v686 = vsub.f32 %v47, %v685
    %v687 = vand.u32 %v686, 4294901760
    %688 = vmatprep.subr.mxu0 %v687
    %v689 = vand.u32 %v46, 4294901760
    %v690 = vsub.f32 %v46, %v689
    %v691 = vand.u32 %v690, 4294901760
    %692 = vmatpush1.msra.mxu0 %v691
    %v693 = vand.u32 %v49, 4294901760
    %v694 = vsub.f32 %v49, %v693
    %v695 = vand.u32 %v694, 4294901760
    %696 = vmatprep.subr.mxu0 %v695
    %v697 = vand.u32 %v48, 4294901760
    %v698 = vsub.f32 %v48, %v697
    %v699 = vand.u32 %v698, 4294901760
    %700 = vmatpush1.msra.mxu0 %v699
    %v701 = vand.u32 %v51, 4294901760
    %v702 = vsub.f32 %v51, %v701
    %v703 = vand.u32 %v702, 4294901760
    %704 = vmatprep.subr.mxu0 %v703
    %v705 = vand.u32 %v50, 4294901760
    %v706 = vsub.f32 %v50, %v705
    %v707 = vand.u32 %v706, 4294901760
    %708 = vmatpush1.msra.mxu0 %v707
    %v709 = vand.u32 %v53, 4294901760
    %v710 = vsub.f32 %v53, %v709
    %v711 = vand.u32 %v710, 4294901760
    %712 = vmatprep.subr.mxu0 %v711
    %v713 = vand.u32 %v52, 4294901760
    %v714 = vsub.f32 %v52, %v713
    %v715 = vand.u32 %v714, 4294901760
    %716 = vmatpush1.msra.mxu0 %v715
    %v717 = vand.u32 %v55, 4294901760
    %v718 = vsub.f32 %v55, %v717
    %v719 = vand.u32 %v718, 4294901760
    %720 = vmatprep.subr.mxu0 %v719
    %v721 = vand.u32 %v54, 4294901760
    %v722 = vsub.f32 %v54, %v721
    %v723 = vand.u32 %v722, 4294901760
    %724 = vmatpush1.msra.mxu0 %v723
    %v725 = vand.u32 %v57, 4294901760
    %v726 = vsub.f32 %v57, %v725
    %v727 = vand.u32 %v726, 4294901760
    %728 = vmatprep.subr.mxu0 %v727
    %v729 = vand.u32 %v56, 4294901760
    %v730 = vsub.f32 %v56, %v729
    %v731 = vand.u32 %v730, 4294901760
    %732 = vmatpush1.msra.mxu0 %v731
    %v733 = vand.u32 %v59, 4294901760
    %v734 = vsub.f32 %v59, %v733
    %v735 = vand.u32 %v734, 4294901760
    %736 = vmatprep.subr.mxu0 %v735
    %v737 = vand.u32 %v58, 4294901760
    %v738 = vsub.f32 %v58, %v737
    %v739 = vand.u32 %v738, 4294901760
    %740 = vmatpush1.msra.mxu0 %v739
    %v741 = vand.u32 %v61, 4294901760
    %v742 = vsub.f32 %v61, %v741
    %v743 = vand.u32 %v742, 4294901760
    %744 = vmatprep.subr.mxu0 %v743
    %v745 = vand.u32 %v60, 4294901760
    %v746 = vsub.f32 %v60, %v745
    %v747 = vand.u32 %v746, 4294901760
    %748 = vmatpush1.msra.mxu0 %v747
    %v749 = vand.u32 %v63, 4294901760
    %v750 = vsub.f32 %v63, %v749
    %v751 = vand.u32 %v750, 4294901760
    %752 = vmatprep.subr.mxu0 %v751
    %v753 = vand.u32 %v62, 4294901760
    %v754 = vsub.f32 %v62, %v753
    %v755 = vand.u32 %v754, 4294901760
    %756 = vmatpush1.msra.mxu0 %v755
    %v757 = vand.u32 %v65, 4294901760
    %v758 = vsub.f32 %v65, %v757
    %v759 = vand.u32 %v758, 4294901760
    %760 = vmatprep.subr.mxu0 %v759
    %v761 = vand.u32 %v64, 4294901760
    %v762 = vsub.f32 %v64, %v761
    %v763 = vand.u32 %v762, 4294901760
    %764 = vmatpush1.msra.mxu0 %v763
    %v765 = vand.u32 %v67, 4294901760
    %v766 = vsub.f32 %v67, %v765
    %v767 = vand.u32 %v766, 4294901760
    %768 = vmatprep.subr.mxu0 %v767
    %v769 = vand.u32 %v66, 4294901760
    %v770 = vsub.f32 %v66, %v769
    %v771 = vand.u32 %v770, 4294901760
    %772 = vmatpush1.msra.mxu0 %v771
    %v773 = vand.u32 %v69, 4294901760
    %v774 = vsub.f32 %v69, %v773
    %v775 = vand.u32 %v774, 4294901760
    %776 = vmatprep.subr.mxu0 %v775
    %v777 = vand.u32 %v68, 4294901760
    %v778 = vsub.f32 %v68, %v777
    %v779 = vand.u32 %v778, 4294901760
    %780 = vmatpush1.msra.mxu0 %v779
    %v781 = vand.u32 %v71, 4294901760
    %v782 = vsub.f32 %v71, %v781
    %v783 = vand.u32 %v782, 4294901760
    %784 = vmatprep.subr.mxu0 %v783
    %v785 = vand.u32 %v70, 4294901760
    %v786 = vsub.f32 %v70, %v785
    %v787 = vand.u32 %v786, 4294901760
    %788 = vmatpush1.msra.mxu0 %v787
    %v789 = vand.u32 %v73, 4294901760
    %v790 = vsub.f32 %v73, %v789
    %v791 = vand.u32 %v790, 4294901760
    %792 = vmatprep.subr.mxu0 %v791
    %v793 = vand.u32 %v72, 4294901760
    %v794 = vsub.f32 %v72, %v793
    %v795 = vand.u32 %v794, 4294901760
    %796 = vmatpush1.msra.mxu0 %v795
    %797 = vmatprep.subr.mxu0 0.0
    %798 = vmatpush1.msra.mxu0 0.0
    %799 = vmatprep.subr.mxu0 0.0
    %800 = vmatpush1.msra.mxu0 0.0
    %801 = vmatprep.subr.mxu0 0.0
    %802 = vmatpush1.msra.mxu0 0.0
    %803 = vmatprep.subr.mxu0 0.0
    %804 = vmatpush1.msra.mxu0 0.0
    %805 = vmatprep.subr.mxu0 0.0
    %806 = vmatpush1.msra.mxu0 0.0
    %807 = vmatprep.subr.mxu0 0.0
    %808 = vmatpush1.msra.mxu0 0.0
    %809 = vmatprep.subr.mxu0 0.0
    %810 = vmatpush1.msra.mxu0 0.0
    %811 = vmatprep.subr.mxu0 0.0
    %812 = vmatpush1.msra.mxu0 0.0
    %813 = vmatprep.subr.mxu0 0.0
    %814 = vmatpush1.msra.mxu0 0.0
    %815 = vmatprep.subr.mxu0 0.0
    %816 = vmatpush1.msra.mxu0 0.0
    %817 = vmatprep.subr.mxu0 0.0
    %818 = vmatpush1.msra.mxu0 0.0
    %819 = vmatprep.subr.mxu0 0.0
    %820 = vmatpush1.msra.mxu0 0.0
    %821 = vmatprep.subr.mxu0 0.0
    %822 = vmatpush1.msra.mxu0 0.0
    %823 = vmatprep.subr.mxu0 0.0
    %824 = vmatpush1.msra.mxu0 0.0
    %825 = vmatprep.subr.mxu0 0.0
    %826 = vmatpush1.msra.mxu0 0.0
    %827 = vmatprep.subr.mxu0 0.0
    %828 = vmatpush1.msra.mxu0 0.0
    %829 = vmatprep.mubr.f32.mxu0 0.0
    %v830 = vand.u32 %v41, 4294901760
    %831 = vmatmul.mubr.f32.gmra.mrb[0].mxu0 %v830
    %v832 = vpop.f32.mrb[0].mxu0
    %v833 = vadd.f32 %v665, %v832
    %v834 = vpop.f32.mrb[0].mxu0
    %v835 = vadd.f32 %v667, %v834
    %836 = vdwg.mxu0
    %v837 = vand.u32 %v43, 4294901760
    %838 = vmatprep.subr.mxu0 %v837
    %v839 = vand.u32 %v42, 4294901760
    %840 = vmatpush1.msra.mxu0 %v839
    %v841 = vand.u32 %v45, 4294901760
    %842 = vmatprep.subr.mxu0 %v841
    %v843 = vand.u32 %v44, 4294901760
    %844 = vmatpush1.msra.mxu0 %v843
    %v845 = vand.u32 %v47, 4294901760
    %846 = vmatprep.subr.mxu0 %v845
    %v847 = vand.u32 %v46, 4294901760
    %848 = vmatpush1.msra.mxu0 %v847
    %v849 = vand.u32 %v49, 4294901760
    %850 = vmatprep.subr.mxu0 %v849
    %v851 = vand.u32 %v48, 4294901760
    %852 = vmatpush1.msra.mxu0 %v851
    %v853 = vand.u32 %v51, 4294901760
    %854 = vmatprep.subr.mxu0 %v853
    %v855 = vand.u32 %v50, 4294901760
    %856 = vmatpush1.msra.mxu0 %v855
    %v857 = vand.u32 %v53, 4294901760
    %858 = vmatprep.subr.mxu0 %v857
    %v859 = vand.u32 %v52, 4294901760
    %860 = vmatpush1.msra.mxu0 %v859
    %v861 = vand.u32 %v55, 4294901760
    %862 = vmatprep.subr.mxu0 %v861
    %v863 = vand.u32 %v54, 4294901760
    %864 = vmatpush1.msra.mxu0 %v863
    %v865 = vand.u32 %v57, 4294901760
    %866 = vmatprep.subr.mxu0 %v865
    %v867 = vand.u32 %v56, 4294901760
    %868 = vmatpush1.msra.mxu0 %v867
    %v869 = vand.u32 %v59, 4294901760
    %870 = vmatprep.subr.mxu0 %v869
    %v871 = vand.u32 %v58, 4294901760
    %872 = vmatpush1.msra.mxu0 %v871
    %v873 = vand.u32 %v61, 4294901760
    %874 = vmatprep.subr.mxu0 %v873
    %v875 = vand.u32 %v60, 4294901760
    %876 = vmatpush1.msra.mxu0 %v875
    %v877 = vand.u32 %v63, 4294901760
    %878 = vmatprep.subr.mxu0 %v877
    %v879 = vand.u32 %v62, 4294901760
    %880 = vmatpush1.msra.mxu0 %v879
    %v881 = vand.u32 %v65, 4294901760
    %882 = vmatprep.subr.mxu0 %v881
    %v883 = vand.u32 %v64, 4294901760
    %884 = vmatpush1.msra.mxu0 %v883
    %v885 = vand.u32 %v67, 4294901760
    %886 = vmatprep.subr.mxu0 %v885
    %v887 = vand.u32 %v66, 4294901760
    %888 = vmatpush1.msra.mxu0 %v887
    %v889 = vand.u32 %v69, 4294901760
    %890 = vmatprep.subr.mxu0 %v889
    %v891 = vand.u32 %v68, 4294901760
    %892 = vmatpush1.msra.mxu0 %v891
    %v893 = vand.u32 %v71, 4294901760
    %894 = vmatprep.subr.mxu0 %v893
    %v895 = vand.u32 %v70, 4294901760
    %896 = vmatpush1.msra.mxu0 %v895
    %v897 = vand.u32 %v73, 4294901760
    %898 = vmatprep.subr.mxu0 %v897
    %v899 = vand.u32 %v72, 4294901760
    %900 = vmatpush1.msra.mxu0 %v899
    %901 = vmatprep.subr.mxu0 0.0
    %902 = vmatpush1.msra.mxu0 0.0
    %903 = vmatprep.subr.mxu0 0.0
    %904 = vmatpush1.msra.mxu0 0.0
    %905 = vmatprep.subr.mxu0 0.0
    %906 = vmatpush1.msra.mxu0 0.0
    %907 = vmatprep.subr.mxu0 0.0
    %908 = vmatpush1.msra.mxu0 0.0
    %909 = vmatprep.subr.mxu0 0.0
    %910 = vmatpush1.msra.mxu0 0.0
    %911 = vmatprep.subr.mxu0 0.0
    %912 = vmatpush1.msra.mxu0 0.0
    %913 = vmatprep.subr.mxu0 0.0
    %914 = vmatpush1.msra.mxu0 0.0
    %915 = vmatprep.subr.mxu0 0.0
    %916 = vmatpush1.msra.mxu0 0.0
    %917 = vmatprep.subr.mxu0 0.0
    %918 = vmatpush1.msra.mxu0 0.0
    %919 = vmatprep.subr.mxu0 0.0
    %920 = vmatpush1.msra.mxu0 0.0
    %921 = vmatprep.subr.mxu0 0.0
    %922 = vmatpush1.msra.mxu0 0.0
    %923 = vmatprep.subr.mxu0 0.0
    %924 = vmatpush1.msra.mxu0 0.0
    %925 = vmatprep.subr.mxu0 0.0
    %926 = vmatpush1.msra.mxu0 0.0
    %927 = vmatprep.subr.mxu0 0.0
    %928 = vmatpush1.msra.mxu0 0.0
    %929 = vmatprep.subr.mxu0 0.0
    %930 = vmatpush1.msra.mxu0 0.0
    %931 = vmatprep.subr.mxu0 0.0
    %932 = vmatpush1.msra.mxu0 0.0
    %933 = vmatprep.mubr.f32.mxu0 0.0
    %v934 = vand.u32 %v41, 4294901760
    %935 = vmatmul.mubr.f32.gmra.mrb[0].mxu0 %v934
    %v936 = vpop.f32.mrb[0].mxu0
    %v937 = vadd.f32 %v833, %v936
    %v938 = vpop.f32.mrb[0].mxu0
    %v939 = vadd.f32 %v835, %v938
    %940 = vdwg.mxu0
    %941 = vst [vmem:[#allocation7] sm:$0xff] %v937
    %942 = vst [vmem:[#allocation7 + $0x8] sm:$0xff] %v939
    // Predicated region
    $region22: #{tpu_custom_call.1} parent=1 // pred_check
      _
    $region23: #{tpu_custom_call.1} parent=1 // pred_check_branch
      %944 = sbr.rel (0) target = $region25
    $region24: #{tpu_custom_call.1} parent=1 // pred_region
      %s946 = ssub.s32 256, 256
      %947 = vsyncadd [#allocation4], %s946
      %s949 = sshll.u32 [#allocation7], 4
      %s950 = int_to_ptr.vmem [resolvable:$true] %s949
      %952 = dma.vmem_to_hbm [thread:$0]  %s950, 256, %s3, [#allocation4]
    $region25: #{tpu_custom_call.1} parent=1 // pred_fallthru
      _
    // Predicated region
    $region26: #{tpu_custom_call.1} parent=1 // pred_check
      _
    $region27: #{tpu_custom_call.1} parent=1 // pred_check_branch
      %954 = sbr.rel (0) target = $region29
    $region28: #{tpu_custom_call.1} parent=1 // pred_region
      %955 = dma.done [#allocation4], 256
    $region29: #{tpu_custom_call.1} parent=1 // pred_fallthru
      _
    %956 = vsyncpa [#allocation3], 1
    %957 = vsyncpa [#allocation6], 1
    %958 = vsyncpa [#allocation4], 1

</llo_original>
